<compile_context>
chip_gen: v7x
topology: tpu7x:2x2x1
jax: 0.10.0
libtpu: 0.0.40
codegen_flags: <defaults>
</compile_context>

<pallas_src>
import math

import jax
import jax.numpy as jnp
from jax.experimental import pallas as pl
from jax.experimental.pallas import tpu as pltpu


def _g2f_kernel(res_ref, nf_img_ref, bnode_ref, nwT_ref, out_ref):
    # res_ref   : (1, C, hw_tile)      feature-map tile, pixels on the lane axis
    # nf_img_ref: (C, 1)               image half of node_fea
    # bnode_ref : (1, nodes, 1)        precomputed input @ node_fea[C:]
    # nwT_ref   : (1, out_ch, nodes)   precomputed (input @ weight)^T
    # out_ref   : (1, out_ch, hw_tile)
    resT = res_ref[0].astype(jnp.float32)          # (C, hw_tile)
    nf_img = nf_img_ref[...].astype(jnp.float32)   # (C, 1)
    bnode = bnode_ref[0].astype(jnp.float32)       # (nodes, 1)
    nwT = nwT_ref[0]                               # (out_ch, nodes)

    # Pixel part of the logit: broadcast-multiply + sublane reduce on the VPU
    # (avoids an MXU matmul whose output would be a single column).
    a = jnp.sum(resT * nf_img, axis=0, keepdims=True)          # (1, hw_tile)

    # logits^T[n, p] = a[p] + bnode[n]   -- pixels stay lane-dense
    logits = a + bnode                                          # (nodes, hw_tile)

    # softmax over nodes (sublane axis)
    logits = logits - jnp.max(logits, axis=0, keepdims=True)
    e = jnp.exp(logits)
    attn = e / jnp.sum(e, axis=0, keepdims=True)                # (nodes, hw_tile)

    # out^T = nw^T @ attn^T  -> (out_ch, hw_tile), lane-dense output store
    outT = jnp.dot(nwT, attn.astype(nwT.dtype),
                   preferred_element_type=jnp.float32)          # (out_ch, hw_tile)
    out_ref[0] = jnp.maximum(outT, 0.0).astype(out_ref.dtype)


def graph_to_featuremaps(inp, res_feature, node_fea, weight, *, hw_tile=1024):
    """inp: (1, B, nodes, hidden) or (B, nodes, hidden); res_feature: (B, C, H, W)."""
    if inp.ndim == 4:
        inp = inp[0]                                    # (B, nodes, hidden)
    batch, channels, h, w = res_feature.shape
    b2, nodes, hidden = inp.shape
    assert b2 == batch
    out_ch = weight.shape[1]
    assert out_ch == channels, "view(res_feature.size()) requires out_ch == channels"
    hw = h * w
    hw_tile = min(hw_tile, hw)
    # TODO(synk): support hw % hw_tile != 0 via pl.cdiv + masked tail tile.
    assert hw % hw_tile == 0
    assert hw_tile % 128 == 0 or hw_tile == hw

    # Batch-only matmuls hoisted out of the pixel-tile loop (tiny XLA ops).
    nf_img = node_fea[:channels, :]                          # (C, 1)
    nf_node = node_fea[channels:, :]                         # (hidden, 1)
    b_node = jnp.einsum("bnh,ho->bno", inp, nf_node)         # (B, nodes, 1)
    nwT = jnp.einsum("bnh,hc->bcn", inp, weight)             # (B, out_ch, nodes)

    # NCHW consumed directly as (B, C, HW): free reshape, no HBM transpose pass.
    res3 = res_feature.reshape(batch, channels, hw)

    num_tiles = hw // hw_tile
    out = pl.pallas_call(
        _g2f_kernel,
        out_shape=jax.ShapeDtypeStruct((batch, out_ch, hw), res_feature.dtype),
        grid_spec=pltpu.PrefetchScalarGridSpec(
            num_scalar_prefetch=0,
            # pixel-tile axis first so megacore (v7x) can shard it even when
            # batch is tiny; both axes are independent -> "parallel".
            grid=(num_tiles, batch),
            in_specs=[
                pl.BlockSpec((1, channels, hw_tile), lambda p, b: (b, 0, p)),
                pl.BlockSpec((channels, 1), lambda p, b: (0, 0)),
                pl.BlockSpec((1, nodes, 1), lambda p, b: (b, 0, 0)),
                pl.BlockSpec((1, out_ch, nodes), lambda p, b: (b, 0, 0)),
            ],
            out_specs=pl.BlockSpec((1, out_ch, hw_tile), lambda p, b: (b, 0, p)),
        ),
        compiler_params=pltpu.CompilerParams(
            dimension_semantics=("parallel", "parallel")),
    )(res3, nf_img, b_node, nwT)

    # (B, out_ch, HW) -> NCHW is now a free reshape (no transpose).
    return out.reshape(batch, out_ch, h, w)


def _reference(inp, res_feature, node_fea, weight):
    if inp.ndim == 4:
        inp = inp[0]
    batch, channels, h, w = res_feature.shape
    hw = h * w
    res_view = jnp.transpose(res_feature.reshape(batch, channels, hw), (0, 2, 1))
    a = res_view @ node_fea[:channels, :]            # (B, HW, 1)
    b = inp @ node_fea[channels:, :]                 # (B, nodes, 1)
    logits = a + jnp.transpose(b, (0, 2, 1))         # (B, HW, nodes)
    attn = jax.nn.softmax(logits, axis=-1)
    nw = inp @ weight                                # (B, nodes, out_ch)
    out = jnp.einsum("bpn,bnc->bpc", attn, nw)
    out = jnp.transpose(out, (0, 2, 1)).reshape(batch, channels, h, w)
    return jax.nn.relu(out)


def _xavier_uniform(key, shape):
    fan_out, fan_in = shape[0], shape[1]
    limit = math.sqrt(6.0 / (fan_in + fan_out))
    return jax.random.uniform(key, shape, jnp.float32, -limit, limit)


if __name__ == "__main__":
    batch, channels, h, w = 2, 4, 16, 16
    nodes, hidden = 7, 32
    output_channels = channels  # required by the module's final view()

    key = jax.random.PRNGKey(0)
    k1, k2, k3, k4 = jax.random.split(key, 4)

    inp = jax.random.normal(k1, (1, batch, nodes, hidden), jnp.float32)
    res_feature = jax.random.normal(k2, (batch, channels, h, w), jnp.float32)
    node_fea = _xavier_uniform(k3, (channels + hidden, 1))
    weight = _xavier_uniform(k4, (hidden, output_channels))

    out = graph_to_featuremaps(inp, res_feature, node_fea, weight)
    out = jax.block_until_ready(out)

    ref = _reference(inp, res_feature, node_fea, weight)
    assert out.shape == res_feature.shape
    assert jnp.allclose(out, ref, rtol=1e-4, atol=1e-4), "mismatch vs reference"

    print("KERNEL_OK")
</pallas_src>

<mosaic_0001>
module attributes {stable_mosaic.version = 11 : i64} {
  func.func @_g2f_kernel(%arg0: i32, %arg1: i32, %arg2: memref<1x4x256xf32, #tpu.memory_space<vmem>>, %arg3: memref<4x1xf32, #tpu.memory_space<vmem>>, %arg4: memref<1x7x1xf32, #tpu.memory_space<vmem>>, %arg5: memref<1x4x7xf32, #tpu.memory_space<vmem>>, %arg6: memref<1x4x256xf32, #tpu.memory_space<vmem>>) attributes {dimension_semantics = [#tpu.dimension_semantics<parallel>, #tpu.dimension_semantics<parallel>], iteration_bounds = array<i64: 1, 2>, scalar_prefetch = 0 : i64, scratch_operands = 0 : i64, tpu.core_type = #tpu.core_type<tc>, window_params = [{transform_indices = @transform_0, window_bounds = array<i64: 1, 4, 256>}, {pipeline_mode = #tpu.pipeline_mode<synchronous>, transform_indices = @transform_1, window_bounds = array<i64: 4, 1>}, {transform_indices = @transform_2, window_bounds = array<i64: 1, 7, 1>}, {transform_indices = @transform_3, window_bounds = array<i64: 1, 4, 7>}, {transform_indices = @transform_4, window_bounds = array<i64: 1, 4, 256>}]} {
    %c0 = arith.constant 0 : index
    %c0_0 = arith.constant 0 : index
    %c0_1 = arith.constant 0 : index
    %0 = vector.load %arg2[%c0, %c0_0, %c0_1] : memref<1x4x256xf32, #tpu.memory_space<vmem>>, vector<1x4x256xf32>
    %1 = vector.shape_cast %0 : vector<1x4x256xf32> to vector<4x256xf32>
    %c0_2 = arith.constant 0 : index
    %c0_3 = arith.constant 0 : index
    %2 = vector.load %arg3[%c0_2, %c0_3] : memref<4x1xf32, #tpu.memory_space<vmem>>, vector<4x1xf32>
    %c0_4 = arith.constant 0 : index
    %c0_5 = arith.constant 0 : index
    %c0_6 = arith.constant 0 : index
    %3 = vector.load %arg4[%c0_4, %c0_5, %c0_6] : memref<1x7x1xf32, #tpu.memory_space<vmem>>, vector<1x7x1xf32>
    %4 = vector.shape_cast %3 : vector<1x7x1xf32> to vector<7x1xf32>
    %c0_7 = arith.constant 0 : index
    %c0_8 = arith.constant 0 : index
    %c0_9 = arith.constant 0 : index
    %5 = vector.load %arg5[%c0_7, %c0_8, %c0_9] : memref<1x4x7xf32, #tpu.memory_space<vmem>>, vector<1x4x7xf32>
    %6 = vector.shape_cast %5 : vector<1x4x7xf32> to vector<4x7xf32>
    %7 = vector.broadcast %2 : vector<4x1xf32> to vector<4x256xf32>
    %8 = arith.mulf %1, %7 : vector<4x256xf32>
    %cst = arith.constant dense<0.000000e+00> : vector<256xf32>
    %9 = vector.multi_reduction <add>, %8, %cst [0] : vector<4x256xf32> to vector<256xf32>
    %10 = vector.shape_cast %9 : vector<256xf32> to vector<1x256xf32>
    %11 = vector.broadcast %10 : vector<1x256xf32> to vector<7x256xf32>
    %12 = vector.broadcast %4 : vector<7x1xf32> to vector<7x256xf32>
    %13 = arith.addf %11, %12 : vector<7x256xf32>
    %cst_10 = arith.constant dense<0xFF800000> : vector<256xf32>
    %14 = vector.multi_reduction <maximumf>, %13, %cst_10 [0] : vector<7x256xf32> to vector<256xf32>
    %15 = vector.shape_cast %14 : vector<256xf32> to vector<1x256xf32>
    %16 = vector.broadcast %15 : vector<1x256xf32> to vector<7x256xf32>
    %17 = arith.subf %13, %16 : vector<7x256xf32>
    %18 = math.exp %17 : vector<7x256xf32>
    %cst_11 = arith.constant dense<0.000000e+00> : vector<256xf32>
    %19 = vector.multi_reduction <add>, %18, %cst_11 [0] : vector<7x256xf32> to vector<256xf32>
    %20 = vector.shape_cast %19 : vector<256xf32> to vector<1x256xf32>
    %21 = vector.broadcast %20 : vector<1x256xf32> to vector<7x256xf32>
    %22 = arith.divf %18, %21 : vector<7x256xf32>
    %cst_12 = arith.constant dense<0.000000e+00> : vector<4x256xf32>
    %23 = tpu.matmul %6, %22, %cst_12 {dimension_numbers = #tpu.dot_dimension_numbers<[1], [0], [0], [1], [0, 0, 1, 1], [], []>} : vector<4x7xf32>, vector<7x256xf32>, vector<4x256xf32> -> vector<4x256xf32>
    %cst_13 = arith.constant 0.000000e+00 : f32
    %24 = vector.broadcast %cst_13 : f32 to vector<4x256xf32>
    %25 = arith.maximumf %23, %24 : vector<4x256xf32>
    %c0_14 = arith.constant 0 : index
    %c0_15 = arith.constant 0 : index
    %c0_16 = arith.constant 0 : index
    %26 = vector.load %arg6[%c0_14, %c0_15, %c0_16] : memref<1x4x256xf32, #tpu.memory_space<vmem>>, vector<1x4x256xf32>
    %27 = vector.shape_cast %26 : vector<1x4x256xf32> to vector<4x256xf32>
    %28 = vector.shape_cast %25 : vector<4x256xf32> to vector<1x4x256xf32>
    tpu.vector_store %arg6[%c0_14, %c0_15, %c0_16], %28 {strides = array<i32>} : memref<1x4x256xf32, #tpu.memory_space<vmem>>, vector<1x4x256xf32>,
    return
  }
  func.func @transform_0(%arg0: i32, %arg1: i32) -> (i32, i32, i32) {
    %c0_i32 = arith.constant 0 : i32
    %c0_i32_0 = arith.constant 0 : i32
    return %arg1, %c0_i32, %arg0 : i32, i32, i32
  }
  func.func @transform_1(%arg0: i32, %arg1: i32) -> (i32, i32) {
    %c0_i32 = arith.constant 0 : i32
    %c0_i32_0 = arith.constant 0 : i32
    %c0_i32_1 = arith.constant 0 : i32
    return %c0_i32, %c0_i32_0 : i32, i32
  }
  func.func @transform_2(%arg0: i32, %arg1: i32) -> (i32, i32, i32) {
    %c0_i32 = arith.constant 0 : i32
    %c0_i32_0 = arith.constant 0 : i32
    %c0_i32_1 = arith.constant 0 : i32
    return %arg1, %c0_i32, %c0_i32_0 : i32, i32, i32
  }
  func.func @transform_3(%arg0: i32, %arg1: i32) -> (i32, i32, i32) {
    %c0_i32 = arith.constant 0 : i32
    %c0_i32_0 = arith.constant 0 : i32
    %c0_i32_1 = arith.constant 0 : i32
    return %arg1, %c0_i32, %c0_i32_0 : i32, i32, i32
  }
  func.func @transform_4(%arg0: i32, %arg1: i32) -> (i32, i32, i32) {
    %c0_i32 = arith.constant 0 : i32
    %c0_i32_0 = arith.constant 0 : i32
    return %arg1, %c0_i32, %arg0 : i32, i32, i32
  }
}

</mosaic_0001>

<llo_original>
// kernel: tpu_custom_call.1
$region0: #{tpu_custom_call.1}
  #allocation0 [shape = 'u32[]', space=smem, size = 0x4, offset = 0x4, fixed_abs, tag = 'smem constant byte address 0x4 - core index']
  #allocation1 [shape = 'u32[144,128]{1,0:T(1,128)}', space=vmem, size = 0x12000, scoped, tag = 'internal scratch']
  %s0 = inlined_call_operand.vmem [shape: f32[2,4,256], index: 0, kind: input, shape index: {}]
  %s1 = inlined_call_operand.vmem [shape: f32[4,1], index: 1, kind: input, shape index: {}]
  %s2 = inlined_call_operand.vmem [shape: f32[2,7,1], index: 2, kind: input, shape index: {}]
  %s3 = inlined_call_operand.vmem [shape: f32[2,4,7], index: 3, kind: input, shape index: {}]
  %s4 = inlined_call_operand.hbm [shape: f32[2,4,256], index: 4, kind: output, shape index: {}]
  %s5 = sld [smem:[#allocation0]]
  $region49: #{tpu_custom_call.1} parent=0
    _
  %s7 = ssub.s32 1, %s5
  %s8 = scalar_select 0, %s7, %s5
  $region1: #{tpu_custom_call.1} parent=0
    #allocation2 [shape = 'u8[8192]{0}', space=vmem, size = 0x2000, scoped, tag = 'output window, operand 0']
    #allocation3 [shape = 's32[2]{0}', space=sflag, size = 0x8, scoped, tag = 'scoped memory for tpu_custom_call.1']
    %9 = vsyncpa [#allocation3], 0
    %s10 = scalar_lea.sflag [#allocation3], 1
    %11 = vsyncpa %s10, 0
    loop: start=0, step=1, limit=4
    $region2: #{tpu_custom_call.1} parent=1 // loop_pre_header
      _
    $region3: #{tpu_custom_call.1} parent=1 // loop_header
      %s13 = sphi 0, %s17
      %p14 = scmp.ge.s32.totalorder %s13, 4
      %s20 = sphi 0, %s32
      %s21 = sphi 0, %s28
      %s22 = sphi 0, %s20
      %s23 = sphi 0, %s21
      %s24 = sphi 0, %s22
      %s25 = sphi 0, %s23
      %s37 = sphi 0, %s39
      %s40 = sphi 0, %s37
      %s41 = sphi 0, %s40
      %s57 = sphi 0, %s41
      %s61 = sphi 0, %s61
      %s63 = sphi 0, %s61
      %s64 = sphi 0, %s63
      %s78 = sphi 0, %s64
      %s84 = sphi 0, %s86
      %s87 = sphi 0, %s84
      %s88 = sphi 0, %s87
      %s104 = sphi 0, %s88
      %s110 = sphi 0, %s112
      %s113 = sphi 0, %s110
      %s114 = sphi 0, %s113
      %s130 = sphi 0, %s114
      %s138 = sphi 0, %s140
      %s141 = sphi 0, %s138
      %s142 = sphi 0, %s141
      %s158 = sphi 0, %s142
    $region4: #{tpu_custom_call.1} parent=1 // loop_header_branch
      %16 = sbr.rel (%p14) target = $region8
    $region5: #{tpu_custom_call.1} parent=1 // loop_body
      %s18 = ssub.s32 %s13, 1
      %s19 = ssub.s32 %s13, 2
      %s26 = sadd.s32 1, %s21
      %p27 = scmp.ge.s32.totalorder %s26, 2
      %s28 = scalar_select %p27, 0, %s26
      %s29 = sadd.s32 1, %s20
      %s30 = scalar_select %p27, %s29, %s20
      %p31 = scmp.ge.s32.totalorder %s30, 1
      %s32 = scalar_select %p31, 0, %s30
      %s33 = ssub.s32 %s21, %s28
      %s34 = ssub.s32 %s20, %s32
      %s35 = sor.u32 %s33, %s34
      %p36 = scmp.eq.s32.totalorder %s35, 0
      %s38 = sadd.s32 %s37, 1
      %s39 = scalar_select %p36, %s37, %s38
      %p42 = pneg %p36
      %p43 = scmp.eq.s32.totalorder %s13, 1
      %p44 = por %p42, %p43
      %p45 = scmp.ne.s32.totalorder %s37, %s40
      %p46 = scmp.eq.s32.totalorder %s13, 0
      %p47 = por %p45, %p46
      %p48 = scmp.ne.s32.totalorder %s37, %s40
      %p49 = scmp.eq.s32.totalorder %s18, 1
      %p50 = por %p48, %p49
      %p51 = scmp.ne.s32.totalorder %s40, %s41
      %p52 = scmp.eq.s32.totalorder %s18, 0
      %p53 = por %p51, %p52
      %p54 = scmp.ne.s32.totalorder %s40, %s41
      %p55 = scmp.eq.s32.totalorder %s19, 1
      %p56 = por %p54, %p55
      %p58 = scmp.ne.s32.totalorder %s41, %s57
      %p59 = scmp.eq.s32.totalorder %s19, 0
      %p60 = por %p58, %p59
      %s62 = sadd.s32 %s61, 1
      %p65 = scmp.eq.s32.totalorder %s13, 1
      %p66 = scmp.ne.s32.totalorder %s61, %s63
      %p67 = scmp.eq.s32.totalorder %s13, 0
      %p68 = por %p66, %p67
      %p69 = scmp.ne.s32.totalorder %s61, %s63
      %p70 = scmp.eq.s32.totalorder %s18, 1
      %p71 = por %p69, %p70
      %p72 = scmp.ne.s32.totalorder %s63, %s64
      %p73 = scmp.eq.s32.totalorder %s18, 0
      %p74 = por %p72, %p73
      %p75 = scmp.ne.s32.totalorder %s63, %s64
      %p76 = scmp.eq.s32.totalorder %s19, 1
      %p77 = por %p75, %p76
      %p79 = scmp.ne.s32.totalorder %s64, %s78
      %p80 = scmp.eq.s32.totalorder %s19, 0
      %p81 = por %p79, %p80
      %s82 = ssub.s32 %s21, %s28
      %p83 = scmp.eq.s32.totalorder %s82, 0
      %s85 = sadd.s32 %s84, 1
      %s86 = scalar_select %p83, %s84, %s85
      %p89 = pneg %p83
      %p90 = scmp.eq.s32.totalorder %s13, 1
      %p91 = por %p89, %p90
      %p92 = scmp.ne.s32.totalorder %s84, %s87
      %p93 = scmp.eq.s32.totalorder %s13, 0
      %p94 = por %p92, %p93
      %p95 = scmp.ne.s32.totalorder %s84, %s87
      %p96 = scmp.eq.s32.totalorder %s18, 1
      %p97 = por %p95, %p96
      %p98 = scmp.ne.s32.totalorder %s87, %s88
      %p99 = scmp.eq.s32.totalorder %s18, 0
      %p100 = por %p98, %p99
      %p101 = scmp.ne.s32.totalorder %s87, %s88
      %p102 = scmp.eq.s32.totalorder %s19, 1
      %p103 = por %p101, %p102
      %p105 = scmp.ne.s32.totalorder %s88, %s104
      %p106 = scmp.eq.s32.totalorder %s19, 0
      %p107 = por %p105, %p106
      %s108 = ssub.s32 %s21, %s28
      %p109 = scmp.eq.s32.totalorder %s108, 0
      %s111 = sadd.s32 %s110, 1
      %s112 = scalar_select %p109, %s110, %s111
      %p115 = pneg %p109
      %p116 = scmp.eq.s32.totalorder %s13, 1
      %p117 = por %p115, %p116
      %p118 = scmp.ne.s32.totalorder %s110, %s113
      %p119 = scmp.eq.s32.totalorder %s13, 0
      %p120 = por %p118, %p119
      %p121 = scmp.ne.s32.totalorder %s110, %s113
      %p122 = scmp.eq.s32.totalorder %s18, 1
      %p123 = por %p121, %p122
      %p124 = scmp.ne.s32.totalorder %s113, %s114
      %p125 = scmp.eq.s32.totalorder %s18, 0
      %p126 = por %p124, %p125
      %p127 = scmp.ne.s32.totalorder %s113, %s114
      %p128 = scmp.eq.s32.totalorder %s19, 1
      %p129 = por %p127, %p128
      %p131 = scmp.ne.s32.totalorder %s114, %s130
      %p132 = scmp.eq.s32.totalorder %s19, 0
      %p133 = por %p131, %p132
      %s134 = ssub.s32 %s21, %s28
      %s135 = ssub.s32 %s20, %s32
      %s136 = sor.u32 %s134, %s135
      %p137 = scmp.eq.s32.totalorder %s136, 0
      %s139 = sadd.s32 %s138, 1
      %s140 = scalar_select %p137, %s138, %s139
      %p143 = pneg %p137
      %p144 = scmp.eq.s32.totalorder %s13, 1
      %p145 = por %p143, %p144
      %p146 = scmp.ne.s32.totalorder %s138, %s141
      %p147 = scmp.eq.s32.totalorder %s13, 0
      %p148 = por %p146, %p147
      %p149 = scmp.ne.s32.totalorder %s138, %s141
      %p150 = scmp.eq.s32.totalorder %s18, 1
      %p151 = por %p149, %p150
      %p152 = scmp.ne.s32.totalorder %s141, %s142
      %p153 = scmp.eq.s32.totalorder %s18, 0
      %p154 = por %p152, %p153
      %p155 = scmp.ne.s32.totalorder %s141, %s142
      %p156 = scmp.eq.s32.totalorder %s19, 1
      %p157 = por %p155, %p156
      %p159 = scmp.ne.s32.totalorder %s142, %s158
      %p160 = scmp.eq.s32.totalorder %s19, 0
      %p161 = por %p159, %p160
      %p162 = scmp.le.s32.totalorder 1, %s13
      %p163 = scmp.lt.s32.totalorder %s13, 3
      %p164 = pnand %p162, %p163
      %p165 = pneg %p164
      // Predicated region
      $region9: #{tpu_custom_call.1} parent=5 // pred_check
        _
      $region10: #{tpu_custom_call.1} parent=5 // pred_check_branch
        %167 = sbr.rel (%p164) target = $region12
      $region11: #{tpu_custom_call.1} parent=5 // pred_region
        %s168 = ssub.s32 %s13, 1
        // Predicated region
        $region13: #{tpu_custom_call.1} parent=11 // pred_check
          %p169 = pneg %p74
        $region14: #{tpu_custom_call.1} parent=11 // pred_check_branch
          %171 = sbr.rel (%p169) target = $region16
        $region15: #{tpu_custom_call.1} parent=11 // pred_region
          _
        $region16: #{tpu_custom_call.1} parent=11 // pred_fallthru
          _
      $region12: #{tpu_custom_call.1} parent=5 // pred_fallthru
        _
      %p172 = scmp.lt.s32.totalorder %s13, 2
      // Predicated region
      $region17: #{tpu_custom_call.1} parent=5 // pred_check
        %p173 = pneg %p172
      $region18: #{tpu_custom_call.1} parent=5 // pred_check_branch
        %175 = sbr.rel (%p173) target = $region20
      $region19: #{tpu_custom_call.1} parent=5 // pred_region
        // Predicated region
        $region21: #{tpu_custom_call.1} parent=19 // pred_check
          %p176 = pneg %p47
        $region22: #{tpu_custom_call.1} parent=19 // pred_check_branch
          %178 = sbr.rel (%p176) target = $region24
        $region23: #{tpu_custom_call.1} parent=19 // pred_region
          %s179 = smul.u32 2, %s20
          %p180 = scmp.lt.s32.totalorder %s21, 1
          %s181 = scalar_select %p180, %s21, 1
          %p182 = scmp.lt.s32.totalorder %s179, 1
          %s183 = scalar_select %p182, %s179, 1
          %s184 = smul.addr %s181, 2
          %s185 = sadd.s32 %s183, %s184
          %s186 = smul.addr %s185, 4
          %s187 = scalar_lea.vmem %s0, %s186
          %s188 = smul.u32 2, %s20
        $region24: #{tpu_custom_call.1} parent=19 // pred_fallthru
          _
        // Predicated region
        $region25: #{tpu_custom_call.1} parent=19 // pred_check
          %p189 = pneg %p94
        $region26: #{tpu_custom_call.1} parent=19 // pred_check_branch
          %191 = sbr.rel (%p189) target = $region28
        $region27: #{tpu_custom_call.1} parent=19 // pred_region
          %p192 = scmp.lt.s32.totalorder %s21, 1
          %s193 = scalar_select %p192, %s21, 1
          %s194 = smul.addr %s193, 8
          %s195 = scalar_lea.vmem %s2, %s194
        $region28: #{tpu_custom_call.1} parent=19 // pred_fallthru
          _
        // Predicated region
        $region29: #{tpu_custom_call.1} parent=19 // pred_check
          %p196 = pneg %p120
        $region30: #{tpu_custom_call.1} parent=19 // pred_check_branch
          %198 = sbr.rel (%p196) target = $region32
        $region31: #{tpu_custom_call.1} parent=19 // pred_region
          %p199 = scmp.lt.s32.totalorder %s21, 1
          %s200 = scalar_select %p199, %s21, 1
          %s201 = smul.addr %s200, 4
          %s202 = scalar_lea.vmem %s3, %s201
        $region32: #{tpu_custom_call.1} parent=19 // pred_fallthru
          _
      $region20: #{tpu_custom_call.1} parent=5 // pred_fallthru
        _
      %p203 = scmp.le.s32.totalorder 1, %s13
      %p204 = scmp.lt.s32.totalorder %s13, 3
      %p205 = pnand %p203, %p204
      %p206 = pneg %p205
      // Predicated region
      $region33: #{tpu_custom_call.1} parent=5 // pred_check
        _
      $region34: #{tpu_custom_call.1} parent=5 // pred_check_branch
        %208 = sbr.rel (%p205) target = $region36
      $region35: #{tpu_custom_call.1} parent=5 // pred_region
        %s209 = ssub.s32 %s13, 1
        %s210 = smul.u32 2, %s22
        %p211 = scmp.lt.s32.totalorder %s23, 1
        %s212 = scalar_select %p211, %s23, 1
        %p213 = scmp.lt.s32.totalorder %s210, 1
        %s214 = scalar_select %p213, %s210, 1
        %s215 = smul.addr %s212, 2
        %s216 = sadd.s32 %s214, %s215
        %s217 = smul.addr %s216, 4
        %s218 = scalar_lea.vmem %s0, %s217
        %p219 = pneg %p53
        %p220 = pneg %p50
        %p221 = pneg %p74
        %p222 = pneg %p71
        %p223 = scmp.lt.s32.totalorder %s23, 1
        %s224 = scalar_select %p223, %s23, 1
        %s225 = smul.addr %s224, 8
        %s226 = scalar_lea.vmem %s2, %s225
        %p227 = pneg %p100
        %p228 = pneg %p97
        %p229 = scmp.lt.s32.totalorder %s23, 1
        %s230 = scalar_select %p229, %s23, 1
        %s231 = smul.addr %s230, 4
        %s232 = scalar_lea.vmem %s3, %s231
        %p233 = pneg %p126
        %p234 = pneg %p123
        %p235 = pneg %p154
        %p236 = pneg %p151
        %s237 = sand.u32 %s141, 1
        %s238 = scalar_lea.sflag [#allocation3], %s237
        %s239 = sand.u32 %s141, 1
        %s240 = smul.addr %s239, 8
        %s241 = scalar_lea.vmem [#allocation2], %s240
        %s242 = smul.u32 2, %s22
        %p243 = scmp.lt.s32.totalorder %s23, 1
        %s244 = scalar_select %p243, %s23, 1
        %p245 = scmp.lt.s32.totalorder %s242, 1
        %s246 = scalar_select %p245, %s242, 1
        %s247 = smul.addr %s244, 2
        %s248 = sadd.s32 %s246, %s247
        %s249 = smul.addr %s248, 4
        %s250 = scalar_lea.vmem %s0, %s249
        %s251 = smul.u32 2, %s22
        %p252 = scmp.lt.s32.totalorder %s23, 1
        %s253 = scalar_select %p252, %s23, 1
        %s254 = smul.addr %s253, 8
        %s255 = scalar_lea.vmem %s2, %s254
        %p256 = scmp.lt.s32.totalorder %s23, 1
        %s257 = scalar_select %p256, %s23, 1
        %s258 = smul.addr %s257, 4
        %s259 = scalar_lea.vmem %s3, %s258
        %s260 = smul.u32 2, %s22
        %v261 = vld [vmem:[%s250] sm:$0xff]
        %v262 = vld [vmem:[%s1] sm:$0xf]
        %v263 = vld [vmem:[%s255] sm:$0x7f]
        %v264 = vld [vmem:[%s259] sm:$0xf]
        %266 = vset.pattern.permute.xlu0 0
        %267 = vperm.xlu0 %266, %v262
        %v268 = vpop.permute.xlu0 %267
        %v270 = vunpack.c.l.s4 839922192
        %v271 = vunpack.c.0.s8 %v270
        %v272 = vlaneseq
        %v273 = vshrl.u32 %v272, 7
        %v274 = vsub.s32 %v271, %v273
        %v275 = vrot.slane %v268, %v274
        %v277 = vmul.f32 %v261, %v275
        %v279 = vcombine.high %v277, %v277
        %vm281 = vcmask 1043456
        %v282 = vsel %vm281, %v277, 0.0
        %v283 = vrot.slane %v282, 4
        %v284 = vadd.f32 %v282, %v283
        %v285 = vrot.slane %v284, 2
        %v286 = vadd.f32 %v284, %v285
        %v287 = vrot.slane %v286, 1
        %v288 = vadd.f32 %v286, %v287
        %v289 = vsel %vm281, %v279, 0.0
        %v290 = vrot.slane %v289, 4
        %v291 = vadd.f32 %v289, %v290
        %v292 = vrot.slane %v291, 2
        %v293 = vadd.f32 %v291, %v292
        %v294 = vrot.slane %v293, 1
        %v295 = vadd.f32 %v293, %v294
        %297 = vset.pattern.permute.xlu0 0
        %298 = vperm.xlu0 %297, %v263
        %v299 = vpop.permute.xlu0 %298
        %v301 = vadd.f32 %v288, %v299
        %v302 = vadd.f32 %v295, %v299
        %vm303 = vcmask 1046528
        %v304 = vsel %vm303, %v301, -inf
        %v305 = vrot.slane %v304, 4
        %v306 = vmax.f32 %v304, %v305
        %v307 = vrot.slane %v306, 2
        %v308 = vmax.f32 %v306, %v307
        %v309 = vrot.slane %v308, 1
        %v310 = vmax.f32 %v308, %v309
        %v311 = vsel %vm303, %v302, -inf
        %v312 = vrot.slane %v311, 4
        %v313 = vmax.f32 %v311, %v312
        %v314 = vrot.slane %v313, 2
        %v315 = vmax.f32 %v313, %v314
        %v316 = vrot.slane %v315, 1
        %v317 = vmax.f32 %v315, %v316
        %v318 = vsub.f32 %v301, %v310
        %v319 = vsub.f32 %v302, %v317
        %v320 = vmul.f32 %v318, 1.442695
        %v321 = vpow.pop %v320
        %v322 = vmul.f32 %v319, 1.442695
        %v323 = vpow.pop %v322
        %v324 = vsel %vm303, %v321, 0.0
        %v325 = vrot.slane %v324, 4
        %v326 = vadd.f32 %v324, %v325
        %v327 = vrot.slane %v326, 2
        %v328 = vadd.f32 %v326, %v327
        %v329 = vrot.slane %v328, 1
        %v330 = vadd.f32 %v328, %v329
        %v331 = vsel %vm303, %v323, 0.0
        %v332 = vrot.slane %v331, 4
        %v333 = vadd.f32 %v331, %v332
        %v334 = vrot.slane %v333, 2
        %v335 = vadd.f32 %v333, %v334
        %v336 = vrot.slane %v335, 1
        %v337 = vadd.f32 %v335, %v336
        %v338 = vrcp.pop %v330
        %v339 = vmul.f32 %v321, %v338
        %v340 = vrcp.pop %v337
        %v341 = vmul.f32 %v323, %v340
        %vm342 = vcmask 56320
        %v344 = vsel %vm342, %v264, 0
        %v347 = vsel %vm303, %v339, 0
        %v350 = vsel %vm303, %v341, 0
        %352 = vmatprep.subr.mxu0 %v350
        %353 = vmatpush1.msra.mxu0 %v347
        %354 = vmatprep.subr.mxu0 0.0
        %355 = vmatpush1.msra.mxu0 0.0
        %356 = vmatprep.subr.mxu0 0.0
        %357 = vmatpush1.msra.mxu0 0.0
        %358 = vmatprep.subr.mxu0 0.0
        %359 = vmatpush1.msra.mxu0 0.0
        %360 = vmatprep.subr.mxu0 0.0
        %361 = vmatpush1.msra.mxu0 0.0
        %362 = vmatprep.subr.mxu0 0.0
        %363 = vmatpush1.msra.mxu0 0.0
        %364 = vmatprep.subr.mxu0 0.0
        %365 = vmatpush1.msra.mxu0 0.0
        %366 = vmatprep.subr.mxu0 0.0
        %367 = vmatpush1.msra.mxu0 0.0
        %368 = vmatprep.subr.mxu0 0.0
        %369 = vmatpush1.msra.mxu0 0.0
        %370 = vmatprep.subr.mxu0 0.0
        %371 = vmatpush1.msra.mxu0 0.0
        %372 = vmatprep.subr.mxu0 0.0
        %373 = vmatpush1.msra.mxu0 0.0
        %374 = vmatprep.subr.mxu0 0.0
        %375 = vmatpush1.msra.mxu0 0.0
        %376 = vmatprep.subr.mxu0 0.0
        %377 = vmatpush1.msra.mxu0 0.0
        %378 = vmatprep.subr.mxu0 0.0
        %379 = vmatpush1.msra.mxu0 0.0
        %380 = vmatprep.subr.mxu0 0.0
        %381 = vmatpush1.msra.mxu0 0.0
        %382 = vmatprep.subr.mxu0 0.0
        %383 = vmatpush1.msra.mxu0 0.0
        %384 = vmatprep.subr.mxu0 0.0
        %385 = vmatpush1.msra.mxu0 0.0
        %386 = vmatprep.subr.mxu0 0.0
        %387 = vmatpush1.msra.mxu0 0.0
        %388 = vmatprep.subr.mxu0 0.0
        %389 = vmatpush1.msra.mxu0 0.0
        %390 = vmatprep.subr.mxu0 0.0
        %391 = vmatpush1.msra.mxu0 0.0
        %392 = vmatprep.subr.mxu0 0.0
        %393 = vmatpush1.msra.mxu0 0.0
        %394 = vmatprep.subr.mxu0 0.0
        %395 = vmatpush1.msra.mxu0 0.0
        %396 = vmatprep.subr.mxu0 0.0
        %397 = vmatpush1.msra.mxu0 0.0
        %398 = vmatprep.subr.mxu0 0.0
        %399 = vmatpush1.msra.mxu0 0.0
        %400 = vmatprep.subr.mxu0 0.0
        %401 = vmatpush1.msra.mxu0 0.0
        %402 = vmatprep.subr.mxu0 0.0
        %403 = vmatpush1.msra.mxu0 0.0
        %404 = vmatprep.subr.mxu0 0.0
        %405 = vmatpush1.msra.mxu0 0.0
        %406 = vmatprep.subr.mxu0 0.0
        %407 = vmatpush1.msra.mxu0 0.0
        %408 = vmatprep.subr.mxu0 0.0
        %409 = vmatpush1.msra.mxu0 0.0
        %410 = vmatprep.subr.mxu0 0.0
        %411 = vmatpush1.msra.mxu0 0.0
        %412 = vmatprep.subr.mxu0 0.0
        %413 = vmatpush1.msra.mxu0 0.0
        %414 = vmatprep.subr.mxu0 0.0
        %415 = vmatpush1.msra.mxu0 0.0
        %416 = vmatprep.mubr.f32.mxu0 0.0
        %417 = vmatmul.mubr.f32.gmra.mrb[0].mxu0 %v344
        %v418 = vpop.f32.mrb[0].mxu0
        %v419 = vadd.f32 0.0, %v418
        %v420 = vpop.f32.mrb[0].mxu0
        %v421 = vadd.f32 0.0, %v420
        %422 = vdwg.mxu0
        %v423 = vmax.f32 %v419, 0.0
        %v424 = vmax.f32 %v421, 0.0
        %v427 = vcombine.low %v423, %v424
        %429 = vst [vmem:[%s241] sm:$0xff] %v427
        %s430 = sand.u32 %s141, 1
        %s431 = scalar_lea.sflag [#allocation3], %s430
        %s432 = sand.u32 %s141, 1
        %s433 = smul.addr %s432, 8
        %s434 = scalar_lea.vmem [#allocation2], %s433
        // Predicated region
        $region37: #{tpu_custom_call.1} parent=35 // pred_check
          %p435 = pneg %p151
        $region38: #{tpu_custom_call.1} parent=35 // pred_check_branch
          %437 = sbr.rel (%p435) target = $region40
        $region39: #{tpu_custom_call.1} parent=35 // pred_region
          %s438 = smul.u32 2, %s22
          %s440 = ssub.s32 128, 128
          %441 = vsyncadd %s431, %s440
          %s442 = smul.addr %s23, 2
          %s443 = sadd.s32 %s438, %s442
          %s444 = smul.addr %s443, 64
          %s445 = scalar_lea.hbm %s4, %s444
          %s447 = sshll.u32 %s434, 4
          %s448 = int_to_ptr.vmem [resolvable:$true] %s447
          %450 = dma.vmem_to_hbm [thread:$0]  %s448, 128, %s445, %s431
        $region40: #{tpu_custom_call.1} parent=35 // pred_fallthru
          _
      $region36: #{tpu_custom_call.1} parent=5 // pred_fallthru
        _
      %p451 = scmp.le.s32.totalorder 2, %s13
      // Predicated region
      $region41: #{tpu_custom_call.1} parent=5 // pred_check
        %p452 = pneg %p451
      $region42: #{tpu_custom_call.1} parent=5 // pred_check_branch
        %454 = sbr.rel (%p452) target = $region44
      $region43: #{tpu_custom_call.1} parent=5 // pred_region
        %s455 = ssub.s32 %s13, 2
        // Predicated region
        $region45: #{tpu_custom_call.1} parent=43 // pred_check
          %p456 = pneg %p157
        $region46: #{tpu_custom_call.1} parent=43 // pred_check_branch
          %458 = sbr.rel (%p456) target = $region48
        $region47: #{tpu_custom_call.1} parent=43 // pred_region
          %s459 = sand.u32 %s142, 1
          %s460 = scalar_lea.sflag [#allocation3], %s459
          %s461 = sand.u32 %s142, 1
          %s462 = smul.addr %s461, 8
          %s463 = scalar_lea.vmem [#allocation2], %s462
          %464 = dma.done %s460, 128
        $region48: #{tpu_custom_call.1} parent=43 // pred_fallthru
          _
      $region44: #{tpu_custom_call.1} parent=5 // pred_fallthru
        _
    $region6: #{tpu_custom_call.1} parent=1 // loop_footer
      %s17 = sadd.s32 1, %s13
    $region7: #{tpu_custom_call.1} parent=1 // loop_footer_branch
      %12 = sbr.rel target = $region3
    $region8: #{tpu_custom_call.1} parent=1 // loop_exit
      _
    %465 = vsyncpa [#allocation3], 1
    %s466 = scalar_lea.sflag [#allocation3], 1
    %467 = vsyncpa %s466, 1

</llo_original>
